<compile_context>
chip_gen: v6e
topology: v6e:2x2x1
jax: 0.10.0
libtpu: 0.0.40
codegen_flags: <defaults>
</compile_context>

<pallas_src>
import math

import jax
import jax.numpy as jnp
from jax import lax
from jax.experimental import pallas as pl
from jax.experimental.pallas import tpu as pltpu


# ---------------------------------------------------------------------------
# helpers
# ---------------------------------------------------------------------------
def _round_up(x, m):
    return (x + m - 1) // m * m


def _pad2d(a, rows, cols):
    r, c = a.shape
    if r == rows and c == cols:
        return a
    return jnp.zeros((rows, cols), a.dtype).at[:r, :c].set(a)


def _pad_row(v, cols):
    v = jnp.asarray(v, jnp.float32)
    n = v.shape[0]
    if n == cols:
        return v.reshape(1, cols)
    return jnp.zeros((1, cols), jnp.float32).at[0, :n].set(v)


def _pad_col(v, rows):
    v = jnp.asarray(v, jnp.float32)
    n = v.shape[0]
    if n == rows:
        return v.reshape(rows, 1)
    return jnp.zeros((rows, 1), jnp.float32).at[:n, 0].set(v)


def _bspec(shape, index_map, buffer_count=None):
    """BlockSpec with an optional deeper pipeline (tuning knob for v7x, tm<=128)."""
    if buffer_count is not None and buffer_count > 2:
        try:
            return pl.BlockSpec(shape, index_map, pipeline_mode=pl.Buffered(buffer_count))
        except Exception:  # older jax: fall back to default double-buffering
            pass
    return pl.BlockSpec(shape, index_map)


def _pick_tn(out_f, w_itemsize):
    """Largest N tile dividing the padded N that still leaves >=2 j-steps
    (so both v7x TensorCores get work even when there is a single batch tile)."""
    np128 = _round_up(out_f, 128)
    cands = (512, 256, 128) if w_itemsize <= 2 else (256, 128)
    for tn in cands:
        if np128 % tn == 0 and np128 // tn >= 2:
            return tn
    return 128


def _pick_tk(in_f, w_itemsize):
    """Largest K tile dividing the padded K, capped by a VMEM budget that is safe
    on every generation (bigger tiles allowed for bf16 weight streams)."""
    kp128 = _round_up(in_f, 128)
    cap = 2048 if w_itemsize <= 2 else 1024
    if kp128 <= cap:
        return kp128
    best = 128
    for tk in range(256, cap + 1, 128):
        if kp128 % tk == 0:
            best = tk
    return best


def _pick_tm(batch):
    """Single i-block (weights streamed exactly once, <=7 pad rows) for B<=512;
    fixed 256 tiles only for very large, MXU-bound batches."""
    return _round_up(batch, 8) if batch <= 512 else 256


# ---------------------------------------------------------------------------
# kernels
# ---------------------------------------------------------------------------
_DN = (((1,), (1,)), ((), ()))  # contract x dim 1 with w dim 1 (no w.T transpose)


def _cast_pair(x, w, mxu_dtype):
    if mxu_dtype is not None:
        return x.astype(mxu_dtype), w.astype(mxu_dtype)
    if x.dtype != w.dtype:
        w = w.astype(x.dtype)
    return x, w


def _make_decomposed_kernel(mxu_dtype, multi_k):
    """Training, small-batch tiles: y = x@Wmu^T + ((x*ein)@Wsig^T)*eout + b.

    Noise is applied to the activations (x*ein, a cheap (1,tk) sublane broadcast)
    and to the output at flush (acc*eout, (1,tn) row broadcast); the weight tiles
    stream straight HBM->MXU with no per-element VPU work, so the kernel is not
    VALU-bound at small tm. Elementwise math stays in f32 (v5e-safe)."""

    def partials(x_ref, wmu_ref, wsig_ref, ein_ref):
        x = x_ref[...]
        xs = x.astype(jnp.float32) * ein_ref[...]          # (tm,tk)*(1,tk) f32 VPU
        xm, wmu = _cast_pair(x, wmu_ref[...], mxu_dtype)
        xsig, wsig = _cast_pair(xs, wsig_ref[...], mxu_dtype)
        p_mu = lax.dot_general(xm, wmu, _DN, preferred_element_type=jnp.float32)
        p_sig = lax.dot_general(xsig, wsig, _DN, preferred_element_type=jnp.float32)
        return p_mu, p_sig

    if not multi_k:
        def kernel(x_ref, wmu_ref, wsig_ref, ein_ref, eout_ref, b_ref, o_ref):
            p_mu, p_sig = partials(x_ref, wmu_ref, wsig_ref, ein_ref)
            o_ref[...] = (p_mu + p_sig * eout_ref[...] + b_ref[...]).astype(o_ref.dtype)
        return kernel

    def kernel(x_ref, wmu_ref, wsig_ref, ein_ref, eout_ref, b_ref, o_ref,
               acc_mu, acc_sig):
        @pl.when(pl.program_id(2) == 0)
        def _():
            acc_mu[...] = jnp.zeros_like(acc_mu)
            acc_sig[...] = jnp.zeros_like(acc_sig)

        p_mu, p_sig = partials(x_ref, wmu_ref, wsig_ref, ein_ref)
        acc_mu[...] += p_mu
        acc_sig[...] += p_sig

        @pl.when(pl.program_id(2) == pl.num_programs(2) - 1)
        def _():
            o_ref[...] = (acc_mu[...] + acc_sig[...] * eout_ref[...]
                          + b_ref[...]).astype(o_ref.dtype)
    return kernel


def _make_fused_kernel(mxu_dtype, multi_k):
    """Training, large-batch tiles (tm>=256): fuse W = Wmu + Wsig*(eout x ein) per
    (tn,tk) tile (f32 fusion, MXU operands cast afterwards) -> one matmul."""

    def fused_w(wmu_ref, wsig_ref, eout_ref, ein_ref):
        return (wmu_ref[...].astype(jnp.float32)
                + wsig_ref[...].astype(jnp.float32) * (eout_ref[...] * ein_ref[...]))

    if not multi_k:
        def kernel(x_ref, wmu_ref, wsig_ref, eout_ref, ein_ref, b_ref, o_ref):
            w = fused_w(wmu_ref, wsig_ref, eout_ref, ein_ref)
            x, w = _cast_pair(x_ref[...], w, mxu_dtype)
            o_ref[...] = (lax.dot_general(x, w, _DN, preferred_element_type=jnp.float32)
                          + b_ref[...]).astype(o_ref.dtype)
        return kernel

    def kernel(x_ref, wmu_ref, wsig_ref, eout_ref, ein_ref, b_ref, o_ref, acc_ref):
        @pl.when(pl.program_id(2) == 0)
        def _():
            acc_ref[...] = jnp.zeros_like(acc_ref)

        w = fused_w(wmu_ref, wsig_ref, eout_ref, ein_ref)
        x, w = _cast_pair(x_ref[...], w, mxu_dtype)
        acc_ref[...] += lax.dot_general(x, w, _DN, preferred_element_type=jnp.float32)

        @pl.when(pl.program_id(2) == pl.num_programs(2) - 1)
        def _():
            o_ref[...] = (acc_ref[...] + b_ref[...]).astype(o_ref.dtype)
    return kernel


def _make_plain_kernel(mxu_dtype, multi_k):
    """Eval mode: plain y = x @ Wmu^T + bias_mu (no sigma/epsilon DMA, no dead FMA)."""

    if not multi_k:
        def kernel(x_ref, wmu_ref, b_ref, o_ref):
            x, w = _cast_pair(x_ref[...], wmu_ref[...], mxu_dtype)
            o_ref[...] = (lax.dot_general(x, w, _DN, preferred_element_type=jnp.float32)
                          + b_ref[...]).astype(o_ref.dtype)
        return kernel

    def kernel(x_ref, wmu_ref, b_ref, o_ref, acc_ref):
        @pl.when(pl.program_id(2) == 0)
        def _():
            acc_ref[...] = jnp.zeros_like(acc_ref)

        x, w = _cast_pair(x_ref[...], wmu_ref[...], mxu_dtype)
        acc_ref[...] += lax.dot_general(x, w, _DN, preferred_element_type=jnp.float32)

        @pl.when(pl.program_id(2) == pl.num_programs(2) - 1)
        def _():
            o_ref[...] = (acc_ref[...] + b_ref[...]).astype(o_ref.dtype)
    return kernel


# ---------------------------------------------------------------------------
# module wrapper
# ---------------------------------------------------------------------------
_FUSED_TM_THRESHOLD = 256  # tm >= this -> fused-weight kernel; below -> decomposition


class NoisyLinearPallas:
    """Pallas TPU forward for NoisyLinear with factorized Gaussian noise.

    Weights are padded / cast to the HBM streaming dtype exactly once here
    (pass weight_dtype=jnp.bfloat16 on v6e/v7x for a bf16-native MXU feed with
    f32 accumulation and half the weight HBM traffic)."""

    def __init__(self, weight_mu, weight_sigma, bias_mu, bias_sigma,
                 *, weight_dtype=None, tile_n=None, tile_k=None):
        weight_mu = jnp.asarray(weight_mu)
        weight_sigma = jnp.asarray(weight_sigma)
        self.out_features, self.in_features = weight_mu.shape
        wdtype = jnp.dtype(weight_dtype) if weight_dtype is not None else jnp.dtype(weight_mu.dtype)
        self.weight_dtype = wdtype

        self.tn = tile_n if tile_n is not None else _pick_tn(self.out_features, wdtype.itemsize)
        self.tk = tile_k if tile_k is not None else _pick_tk(self.in_features, wdtype.itemsize)
        self.Np = _round_up(self.out_features, self.tn)
        self.Kp = _round_up(self.in_features, self.tk)

        # Pad & cast ONCE (no per-call HBM copies; no-op when already aligned).
        self.weight_mu = _pad2d(weight_mu.astype(wdtype), self.Np, self.Kp)
        self.weight_sigma = _pad2d(weight_sigma.astype(wdtype), self.Np, self.Kp)
        self.bias_mu = jnp.asarray(bias_mu, jnp.float32)
        self.bias_sigma = jnp.asarray(bias_sigma, jnp.float32)

    def __call__(self, x, eps_in=None, eps_out=None, bias_epsilon=None,
                 training=True, mxu_dtype="auto", weight_pipeline_depth=None):
        # weight_pipeline_depth: tuning knob — sweep 3 on v7x when tm<=128 to hide
        # DMA issue latency on the Wmu/Wsig streams (default double-buffering).
        B, in_f = x.shape
        assert in_f == self.in_features, (in_f, self.in_features)
        out_f, Np, Kp, tn, tk = self.out_features, self.Np, self.Kp, self.tn, self.tk

        if mxu_dtype == "auto":
            mxu_dtype = jnp.bfloat16 if self.weight_dtype == jnp.dtype(jnp.bfloat16) else None

        tm = _pick_tm(B)
        Bp = _round_up(B, tm)
        gi, gj, gk = Bp // tm, Np // tn, Kp // tk
        multi_k = gk > 1

        # Pad x only when needed.
        xp = x if (Bp == B and Kp == in_f) else \
            jnp.zeros((Bp, Kp), x.dtype).at[:B, :in_f].set(x)

        out_dtype = x.dtype
        x_it = jnp.dtype(x.dtype).itemsize
        w_it = self.weight_dtype.itemsize
        o_it = jnp.dtype(out_dtype).itemsize
        n_w_streams = 2 if training else 1

        # Double-buffered working set -> explicit VMEM limit (capped for v7x's
        # 64 MiB physical VMEM; also lifts v5e's 16 MiB default scoped limit).
        ws = (2 * tm * tk * x_it + 2 * n_w_streams * tn * tk * w_it
              + 2 * tm * tn * o_it + 2 * tm * tn * 4)
        vmem_limit = int(min(48 * 2**20, max(32 * 2**20, 2 * ws)))

        x_spec = pl.BlockSpec((tm, tk), lambda i, j, k: (i, k))
        w_spec = _bspec((tn, tk), lambda i, j, k: (j, k), weight_pipeline_depth)
        b_spec = pl.BlockSpec((1, tn), lambda i, j, k: (0, j))
        out_spec = pl.BlockSpec((tm, tn), lambda i, j, k: (i, j))

        compiler_params = pltpu.CompilerParams(
            dimension_semantics=("parallel", "parallel", "arbitrary"),
            vmem_limit_bytes=vmem_limit)

        if training:
            if eps_in is None or eps_out is None:
                raise ValueError("training=True requires eps_in and eps_out")
            if bias_epsilon is None:
                bias_epsilon = eps_out  # factorized noise: bias_epsilon == eps_out
            bias = self.bias_mu + self.bias_sigma * jnp.asarray(bias_epsilon, jnp.float32)
            bp = _pad_row(bias, Np)
            ein = _pad_row(eps_in, Kp)

            if tm < _FUSED_TM_THRESHOLD:
                kernel = _make_decomposed_kernel(mxu_dtype, multi_k)
                n_matmuls = 2
                in_specs = [x_spec, w_spec, w_spec,
                            pl.BlockSpec((1, tk), lambda i, j, k: (0, k)),  # eps_in row
                            pl.BlockSpec((1, tn), lambda i, j, k: (0, j)),  # eps_out row
                            b_spec]
                args = (xp, self.weight_mu, self.weight_sigma, ein, _pad_row(eps_out, Np), bp)
                scratch = ([pltpu.VMEM((tm, tn), jnp.float32),
                            pltpu.VMEM((tm, tn), jnp.float32)] if multi_k else [])
            else:
                kernel = _make_fused_kernel(mxu_dtype, multi_k)
                n_matmuls = 1
                in_specs = [x_spec, w_spec, w_spec,
                            pl.BlockSpec((tn, 1), lambda i, j, k: (j, 0)),  # eps_out col
                            pl.BlockSpec((1, tk), lambda i, j, k: (0, k)),  # eps_in row
                            b_spec]
                args = (xp, self.weight_mu, self.weight_sigma, _pad_col(eps_out, Np), ein, bp)
                scratch = [pltpu.VMEM((tm, tn), jnp.float32)] if multi_k else []
        else:
            kernel = _make_plain_kernel(mxu_dtype, multi_k)
            n_matmuls = 1
            in_specs = [x_spec, w_spec, b_spec]
            args = (xp, self.weight_mu, _pad_row(self.bias_mu, Np))
            scratch = [pltpu.VMEM((tm, tn), jnp.float32)] if multi_k else []

        cost = pl.CostEstimate(
            flops=int(n_matmuls * 2 * Bp * Np * Kp),
            transcendentals=0,
            bytes_accessed=int(n_w_streams * Np * Kp * w_it + Bp * Kp * x_it + Bp * Np * o_it))

        out = pl.pallas_call(
            kernel,
            out_shape=jax.ShapeDtypeStruct((Bp, Np), out_dtype),
            grid=(gi, gj, gk),
            in_specs=in_specs,
            out_specs=out_spec,
            scratch_shapes=scratch,
            compiler_params=compiler_params,
            cost_estimate=cost,
        )(*args)

        if Bp == B and Np == out_f:
            return out                      # no trailing-slice copy when aligned
        return out[:B, :out_f]


# ---------------------------------------------------------------------------
# parameter / noise init mirroring the PyTorch module (host-side, plain JAX)
# ---------------------------------------------------------------------------
def _scale_noise(key, size):
    x = jax.random.normal(key, (size,), dtype=jnp.float32)
    return jnp.sign(x) * jnp.sqrt(jnp.abs(x))


def make_noisy_linear_params(key, in_features, out_features, std_init=0.5):
    k_wmu, k_bmu, k_ein, k_eout = jax.random.split(key, 4)
    mu_range = 1.0 / math.sqrt(in_features)
    weight_mu = jax.random.uniform(k_wmu, (out_features, in_features),
                                   jnp.float32, -mu_range, mu_range)
    weight_sigma = jnp.full((out_features, in_features),
                            std_init / math.sqrt(in_features), jnp.float32)
    bias_mu = jax.random.uniform(k_bmu, (out_features,), jnp.float32, -mu_range, mu_range)
    bias_sigma = jnp.full((out_features,), std_init / math.sqrt(out_features), jnp.float32)
    eps_in = _scale_noise(k_ein, in_features)
    eps_out = _scale_noise(k_eout, out_features)
    return dict(weight_mu=weight_mu, weight_sigma=weight_sigma,
                bias_mu=bias_mu, bias_sigma=bias_sigma,
                eps_in=eps_in, eps_out=eps_out)


def _ref_forward(x, p, training):
    if training:
        w = p["weight_mu"] + p["weight_sigma"] * jnp.outer(p["eps_out"], p["eps_in"])
        b = p["bias_mu"] + p["bias_sigma"] * p["eps_out"]
        return jnp.matmul(x, w.T, precision=lax.Precision.HIGHEST) + b
    return jnp.matmul(x, p["weight_mu"].T, precision=lax.Precision.HIGHEST) + p["bias_mu"]


if __name__ == "__main__":
    def check(name, got, want, atol=1e-5, rtol=1e-5):
        assert got.shape == want.shape, (name, got.shape, want.shape)
        assert jnp.allclose(got, want, atol=atol, rtol=rtol), \
            (name, float(jnp.max(jnp.abs(got - want))))

    key = jax.random.PRNGKey(0)
    k1, k2, kx = jax.random.split(key, 3)

    # --- 1. small RL-sized layer: single-K decomposed (train) + plain (eval) ----
    p = make_noisy_linear_params(k1, 32, 64)
    layer = NoisyLinearPallas(p["weight_mu"], p["weight_sigma"],
                              p["bias_mu"], p["bias_sigma"])
    x = jax.random.normal(kx, (8, 32), dtype=jnp.float32)
    out = jax.block_until_ready(layer(x, p["eps_in"], p["eps_out"], training=True))
    check("small/train", out, _ref_forward(x, p, True))
    out = jax.block_until_ready(layer(x, training=False))
    check("small/eval", out, _ref_forward(x, p, False))

    # bf16 weight streams (v6e/v7x fast path), f32 accumulation.
    layer_bf16 = NoisyLinearPallas(p["weight_mu"], p["weight_sigma"],
                                   p["bias_mu"], p["bias_sigma"],
                                   weight_dtype=jnp.bfloat16)
    out = jax.block_until_ready(layer_bf16(x, p["eps_in"], p["eps_out"], training=True))
    check("small/train/bf16", out, _ref_forward(x, p, True), atol=5e-2, rtol=5e-2)

    # --- 2. batch >= 256: fused-weight path + x padding + output slice ----------
    p2 = make_noisy_linear_params(k2, 384, 256)
    layer2 = NoisyLinearPallas(p2["weight_mu"], p2["weight_sigma"],
                               p2["bias_mu"], p2["bias_sigma"])
    x2 = jax.random.normal(jax.random.PRNGKey(1), (300, 384), dtype=jnp.float32)
    out = jax.block_until_ready(layer2(x2, p2["eps_in"], p2["eps_out"], training=True))
    check("fused/train", out, _ref_forward(x2, p2, True), atol=2e-3, rtol=2e-3)

    # --- 3. multi-K accumulation paths (forced small tile_k) ---------------------
    p3 = make_noisy_linear_params(jax.random.PRNGKey(2), 256, 256)
    layer3 = NoisyLinearPallas(p3["weight_mu"], p3["weight_sigma"],
                               p3["bias_mu"], p3["bias_sigma"], tile_k=128)
    x3 = jax.random.normal(jax.random.PRNGKey(3), (16, 256), dtype=jnp.float32)
    out = jax.block_until_ready(layer3(x3, p3["eps_in"], p3["eps_out"], training=True))
    check("decomposed/multiK", out, _ref_forward(x3, p3, True), atol=2e-3, rtol=2e-3)

    x3b = jax.random.normal(jax.random.PRNGKey(4), (264, 256), dtype=jnp.float32)
    out = jax.block_until_ready(layer3(x3b, p3["eps_in"], p3["eps_out"], training=True))
    check("fused/multiK", out, _ref_forward(x3b, p3, True), atol=2e-3, rtol=2e-3)

    out = jax.block_until_ready(layer3(x3, training=False))
    check("plain/multiK", out, _ref_forward(x3, p3, False), atol=2e-3, rtol=2e-3)

    print("KERNEL_OK")
</pallas_src>

<mosaic_0001>
module attributes {stable_mosaic.version = 11 : i64} {
  func.func @kernel(%arg0: i32, %arg1: i32, %arg2: i32, %arg3: memref<8x128xf32, #tpu.memory_space<vmem>>, %arg4: memref<128x128xf32, #tpu.memory_space<vmem>>, %arg5: memref<128x128xf32, #tpu.memory_space<vmem>>, %arg6: memref<1x128xf32, #tpu.memory_space<vmem>>, %arg7: memref<1x128xf32, #tpu.memory_space<vmem>>, %arg8: memref<1x128xf32, #tpu.memory_space<vmem>>, %arg9: memref<8x128xf32, #tpu.memory_space<vmem>>) attributes {dimension_semantics = [#tpu.dimension_semantics<parallel>, #tpu.dimension_semantics<parallel>, #tpu.dimension_semantics<arbitrary>], iteration_bounds = array<i64: 1, 1, 1>, scalar_prefetch = 0 : i64, scratch_operands = 0 : i64, tpu.core_type = #tpu.core_type<tc>, window_params = [{transform_indices = @transform_0, window_bounds = array<i64: 8, 128>}, {transform_indices = @transform_1, window_bounds = array<i64: 128, 128>}, {transform_indices = @transform_2, window_bounds = array<i64: 128, 128>}, {transform_indices = @transform_3, window_bounds = array<i64: 1, 128>}, {transform_indices = @transform_4, window_bounds = array<i64: 1, 128>}, {transform_indices = @transform_5, window_bounds = array<i64: 1, 128>}, {transform_indices = @transform_6, window_bounds = array<i64: 8, 128>}]} {
    %c0 = arith.constant 0 : index
    %c0_0 = arith.constant 0 : index
    %0 = vector.load %arg3[%c0, %c0_0] : memref<8x128xf32, #tpu.memory_space<vmem>>, vector<8x128xf32>
    %c0_1 = arith.constant 0 : index
    %c0_2 = arith.constant 0 : index
    %1 = vector.load %arg6[%c0_1, %c0_2] : memref<1x128xf32, #tpu.memory_space<vmem>>, vector<1x128xf32>
    %2 = vector.broadcast %1 : vector<1x128xf32> to vector<8x128xf32>
    %3 = arith.mulf %0, %2 : vector<8x128xf32>
    %c0_3 = arith.constant 0 : index
    %c0_4 = arith.constant 0 : index
    %4 = vector.load %arg4[%c0_3, %c0_4] : memref<128x128xf32, #tpu.memory_space<vmem>>, vector<128x128xf32>
    %c0_5 = arith.constant 0 : index
    %c0_6 = arith.constant 0 : index
    %5 = vector.load %arg5[%c0_5, %c0_6] : memref<128x128xf32, #tpu.memory_space<vmem>>, vector<128x128xf32>
    %cst = arith.constant dense<0.000000e+00> : vector<8x128xf32>
    %6 = tpu.matmul %0, %4, %cst {dimension_numbers = #tpu.dot_dimension_numbers<[1], [1], [0], [0], [0, 0, 1, 0], [], []>} : vector<8x128xf32>, vector<128x128xf32>, vector<8x128xf32> -> vector<8x128xf32>
    %cst_7 = arith.constant dense<0.000000e+00> : vector<8x128xf32>
    %7 = tpu.matmul %3, %5, %cst_7 {dimension_numbers = #tpu.dot_dimension_numbers<[1], [1], [0], [0], [0, 0, 1, 0], [], []>} : vector<8x128xf32>, vector<128x128xf32>, vector<8x128xf32> -> vector<8x128xf32>
    %c0_8 = arith.constant 0 : index
    %c0_9 = arith.constant 0 : index
    %8 = vector.load %arg7[%c0_8, %c0_9] : memref<1x128xf32, #tpu.memory_space<vmem>>, vector<1x128xf32>
    %9 = vector.broadcast %8 : vector<1x128xf32> to vector<8x128xf32>
    %10 = arith.mulf %7, %9 : vector<8x128xf32>
    %11 = arith.addf %6, %10 : vector<8x128xf32>
    %c0_10 = arith.constant 0 : index
    %c0_11 = arith.constant 0 : index
    %12 = vector.load %arg8[%c0_10, %c0_11] : memref<1x128xf32, #tpu.memory_space<vmem>>, vector<1x128xf32>
    %13 = vector.broadcast %12 : vector<1x128xf32> to vector<8x128xf32>
    %14 = arith.addf %11, %13 : vector<8x128xf32>
    %c0_12 = arith.constant 0 : index
    %c0_13 = arith.constant 0 : index
    %15 = vector.load %arg9[%c0_12, %c0_13] : memref<8x128xf32, #tpu.memory_space<vmem>>, vector<8x128xf32>
    tpu.vector_store %arg9[%c0_12, %c0_13], %14 {strides = array<i32>} : memref<8x128xf32, #tpu.memory_space<vmem>>, vector<8x128xf32>,
    return
  }
  func.func @transform_0(%arg0: i32, %arg1: i32, %arg2: i32) -> (i32, i32) {
    %c0_i32 = arith.constant 0 : i32
    return %arg0, %arg2 : i32, i32
  }
  func.func @transform_1(%arg0: i32, %arg1: i32, %arg2: i32) -> (i32, i32) {
    %c0_i32 = arith.constant 0 : i32
    return %arg1, %arg2 : i32, i32
  }
  func.func @transform_2(%arg0: i32, %arg1: i32, %arg2: i32) -> (i32, i32) {
    %c0_i32 = arith.constant 0 : i32
    return %arg1, %arg2 : i32, i32
  }
  func.func @transform_3(%arg0: i32, %arg1: i32, %arg2: i32) -> (i32, i32) {
    %c0_i32 = arith.constant 0 : i32
    %c0_i32_0 = arith.constant 0 : i32
    return %c0_i32, %arg2 : i32, i32
  }
  func.func @transform_4(%arg0: i32, %arg1: i32, %arg2: i32) -> (i32, i32) {
    %c0_i32 = arith.constant 0 : i32
    %c0_i32_0 = arith.constant 0 : i32
    return %c0_i32, %arg1 : i32, i32
  }
  func.func @transform_5(%arg0: i32, %arg1: i32, %arg2: i32) -> (i32, i32) {
    %c0_i32 = arith.constant 0 : i32
    %c0_i32_0 = arith.constant 0 : i32
    return %c0_i32, %arg1 : i32, i32
  }
  func.func @transform_6(%arg0: i32, %arg1: i32, %arg2: i32) -> (i32, i32) {
    %c0_i32 = arith.constant 0 : i32
    return %arg0, %arg1 : i32, i32
  }
}

</mosaic_0001>

<llo_original>
// kernel: tpu_custom_call.1
$region0: #{tpu_custom_call.1}
  #allocation0 [shape = 'u32[]', space=smem, size = 0x4, offset = 0x4, fixed_abs, tag = 'smem constant byte address 0x4 - core index']
  #allocation1 [shape = 'u32[144,128]{1,0:T(1,128)}', space=vmem, size = 0x12000, scoped, tag = 'internal scratch']
  %s0 = inlined_call_operand.hbm [shape: f32[8,128], index: 0, kind: input, shape index: {}]
  %s1 = inlined_call_operand.hbm [shape: f32[128,128], index: 1, kind: input, shape index: {}]
  %s2 = inlined_call_operand.hbm [shape: f32[128,128], index: 2, kind: input, shape index: {}]
  %s3 = inlined_call_operand.vmem [shape: f32[1,128], index: 3, kind: input, shape index: {}]
  %s4 = inlined_call_operand.vmem [shape: f32[1,128], index: 4, kind: input, shape index: {}]
  %s5 = inlined_call_operand.vmem [shape: f32[1,128], index: 5, kind: input, shape index: {}]
  %s6 = inlined_call_operand.hbm [shape: f32[8,128], index: 6, kind: output, shape index: {}]
  %s7 = sld [smem:[#allocation0]]
  $region46: #{tpu_custom_call.1} parent=0
    _
  %s9 = ssub.s32 1, %s7
  %s10 = scalar_select 0, %s9, %s7
  $region1: #{tpu_custom_call.1} parent=0
    #allocation2 [shape = 'u8[4096]{0}', space=vmem, size = 0x1000, scoped, tag = 'input window, operand 0, single buffered']
    #allocation3 [shape = 's32[1]{0}', space=sflag, size = 0x4, scoped, tag = 'scoped memory for tpu_custom_call.1']
    #allocation4 [shape = 's32[1]{0}', space=sflag, size = 0x4, scoped, tag = 'scoped memory for tpu_custom_call.1']
    #allocation5 [shape = 'u8[65536]{0}', space=vmem, size = 0x10000, scoped, tag = 'input window, operand 1, single buffered']
    #allocation6 [shape = 's32[1]{0}', space=sflag, size = 0x4, scoped, tag = 'scoped memory for tpu_custom_call.1']
    #allocation7 [shape = 'u8[65536]{0}', space=vmem, size = 0x10000, scoped, tag = 'input window, operand 2, single buffered']
    #allocation8 [shape = 'u8[4096]{0}', space=vmem, size = 0x1000, scoped, tag = 'output window, operand 0, single buffered']
    %11 = vsyncpa [#allocation3], 0
    %12 = vsyncpa [#allocation6], 0
    %13 = vsyncpa [#allocation4], 0
    // Predicated region
    $region2: #{tpu_custom_call.1} parent=1 // pred_check
      _
    $region3: #{tpu_custom_call.1} parent=1 // pred_check_branch
      %15 = sbr.rel (0) target = $region5
    $region4: #{tpu_custom_call.1} parent=1 // pred_region
      %s17 = ssub.s32 128, 128
      %18 = vsyncadd [#allocation3], %s17
      %s20 = sshll.u32 [#allocation2], 4
      %s21 = int_to_ptr.vmem [resolvable:$true] %s20
      %23 = dma.hbm_to_vmem [thread:$0]  %s0, 128, %s21, [#allocation3]
    $region5: #{tpu_custom_call.1} parent=1 // pred_fallthru
      _
    // Predicated region
    $region6: #{tpu_custom_call.1} parent=1 // pred_check
      _
    $region7: #{tpu_custom_call.1} parent=1 // pred_check_branch
      %25 = sbr.rel (0) target = $region9
    $region8: #{tpu_custom_call.1} parent=1 // pred_region
      %s27 = ssub.s32 2048, 2048
      %28 = vsyncadd [#allocation6], %s27
      %s29 = sshll.u32 [#allocation5], 4
      %s30 = int_to_ptr.vmem [resolvable:$true] %s29
      %35 = dma.hbm_to_vmem [thread:$0]  %s1, 2048, %s30, [#allocation6], 128, 128, 8
    $region9: #{tpu_custom_call.1} parent=1 // pred_fallthru
      _
    // Predicated region
    $region10: #{tpu_custom_call.1} parent=1 // pred_check
      _
    $region11: #{tpu_custom_call.1} parent=1 // pred_check_branch
      %37 = sbr.rel (0) target = $region13
    $region12: #{tpu_custom_call.1} parent=1 // pred_region
      %s39 = ssub.s32 2048, 2048
      %40 = vsyncadd [#allocation6], %s39
      %s41 = sshll.u32 [#allocation7], 4
      %s42 = int_to_ptr.vmem [resolvable:$true] %s41
      %47 = dma.hbm_to_vmem [thread:$0]  %s2, 2048, %s42, [#allocation6], 128, 128, 8
    $region13: #{tpu_custom_call.1} parent=1 // pred_fallthru
      _
    // Predicated region
    $region14: #{tpu_custom_call.1} parent=1 // pred_check
      _
    $region15: #{tpu_custom_call.1} parent=1 // pred_check_branch
      %49 = sbr.rel (0) target = $region17
    $region16: #{tpu_custom_call.1} parent=1 // pred_region
      _
    $region17: #{tpu_custom_call.1} parent=1 // pred_fallthru
      _
    // Predicated region
    $region18: #{tpu_custom_call.1} parent=1 // pred_check
      _
    $region19: #{tpu_custom_call.1} parent=1 // pred_check_branch
      %51 = sbr.rel (0) target = $region21
    $region20: #{tpu_custom_call.1} parent=1 // pred_region
      _
    $region21: #{tpu_custom_call.1} parent=1 // pred_fallthru
      _
    // Predicated region
    $region22: #{tpu_custom_call.1} parent=1 // pred_check
      _
    $region23: #{tpu_custom_call.1} parent=1 // pred_check_branch
      %53 = sbr.rel (0) target = $region25
    $region24: #{tpu_custom_call.1} parent=1 // pred_region
      _
    $region25: #{tpu_custom_call.1} parent=1 // pred_fallthru
      _
    // Predicated region
    $region26: #{tpu_custom_call.1} parent=1 // pred_check
      _
    $region27: #{tpu_custom_call.1} parent=1 // pred_check_branch
      %55 = sbr.rel (0) target = $region29
    $region28: #{tpu_custom_call.1} parent=1 // pred_region
      %56 = dma.done [#allocation3], 128
    $region29: #{tpu_custom_call.1} parent=1 // pred_fallthru
      _
    // Predicated region
    $region30: #{tpu_custom_call.1} parent=1 // pred_check
      _
    $region31: #{tpu_custom_call.1} parent=1 // pred_check_branch
      %58 = sbr.rel (0) target = $region33
    $region32: #{tpu_custom_call.1} parent=1 // pred_region
      %59 = dma.done [#allocation6], 2048
    $region33: #{tpu_custom_call.1} parent=1 // pred_fallthru
      _
    // Predicated region
    $region34: #{tpu_custom_call.1} parent=1 // pred_check
      _
    $region35: #{tpu_custom_call.1} parent=1 // pred_check_branch
      %61 = sbr.rel (0) target = $region37
    $region36: #{tpu_custom_call.1} parent=1 // pred_region
      %62 = dma.done [#allocation6], 2048
    $region37: #{tpu_custom_call.1} parent=1 // pred_fallthru
      _
    %v63 = vld [vmem:[#allocation2] sm:$0xff]
    %v64 = vld [vmem:[%s3] sm:$0x1]
    %v66 = vlaneseq
    %v67 = vshrl.u32 %v66, 7
    %v68 = vsub.s32 0, %v67
    %v69 = vrot.slane %v64, %v68
    %v71 = vmul.f32 %v63, %v69
    %v72 = vld [vmem:[#allocation5] sm:$0xff]
    %v73 = vld [vmem:[#allocation5 + $0x8] sm:$0xff]
    %v74 = vld [vmem:[#allocation5 + $0x10] sm:$0xff]
    %v75 = vld [vmem:[#allocation5 + $0x18] sm:$0xff]
    %v76 = vld [vmem:[#allocation5 + $0x20] sm:$0xff]
    %v77 = vld [vmem:[#allocation5 + $0x28] sm:$0xff]
    %v78 = vld [vmem:[#allocation5 + $0x30] sm:$0xff]
    %v79 = vld [vmem:[#allocation5 + $0x38] sm:$0xff]
    %v80 = vld [vmem:[#allocation5 + $0x40] sm:$0xff]
    %v81 = vld [vmem:[#allocation5 + $0x48] sm:$0xff]
    %v82 = vld [vmem:[#allocation5 + $0x50] sm:$0xff]
    %v83 = vld [vmem:[#allocation5 + $0x58] sm:$0xff]
    %v84 = vld [vmem:[#allocation5 + $0x60] sm:$0xff]
    %v85 = vld [vmem:[#allocation5 + $0x68] sm:$0xff]
    %v86 = vld [vmem:[#allocation5 + $0x70] sm:$0xff]
    %v87 = vld [vmem:[#allocation5 + $0x78] sm:$0xff]
    %v88 = vld [vmem:[#allocation7] sm:$0xff]
    %v89 = vld [vmem:[#allocation7 + $0x8] sm:$0xff]
    %v90 = vld [vmem:[#allocation7 + $0x10] sm:$0xff]
    %v91 = vld [vmem:[#allocation7 + $0x18] sm:$0xff]
    %v92 = vld [vmem:[#allocation7 + $0x20] sm:$0xff]
    %v93 = vld [vmem:[#allocation7 + $0x28] sm:$0xff]
    %v94 = vld [vmem:[#allocation7 + $0x30] sm:$0xff]
    %v95 = vld [vmem:[#allocation7 + $0x38] sm:$0xff]
    %v96 = vld [vmem:[#allocation7 + $0x40] sm:$0xff]
    %v97 = vld [vmem:[#allocation7 + $0x48] sm:$0xff]
    %v98 = vld [vmem:[#allocation7 + $0x50] sm:$0xff]
    %v99 = vld [vmem:[#allocation7 + $0x58] sm:$0xff]
    %v100 = vld [vmem:[#allocation7 + $0x60] sm:$0xff]
    %v101 = vld [vmem:[#allocation7 + $0x68] sm:$0xff]
    %v102 = vld [vmem:[#allocation7 + $0x70] sm:$0xff]
    %v103 = vld [vmem:[#allocation7 + $0x78] sm:$0xff]
    %104 = vmatprep.subr.mxu0 0.0
    %105 = vmatpush1.xpose.msra.mxu0 %v103
    %106 = vmatprep.subr.mxu0 0.0
    %107 = vmatpush1.xpose.msra.mxu0 %v102
    %108 = vmatprep.subr.mxu0 0.0
    %109 = vmatpush1.xpose.msra.mxu0 %v101
    %110 = vmatprep.subr.mxu0 0.0
    %111 = vmatpush1.xpose.msra.mxu0 %v100
    %112 = vmatprep.subr.mxu0 0.0
    %113 = vmatpush1.xpose.msra.mxu0 %v99
    %114 = vmatprep.subr.mxu0 0.0
    %115 = vmatpush1.xpose.msra.mxu0 %v98
    %116 = vmatprep.subr.mxu0 0.0
    %117 = vmatpush1.xpose.msra.mxu0 %v97
    %118 = vmatprep.subr.mxu0 0.0
    %119 = vmatpush1.xpose.msra.mxu0 %v96
    %120 = vmatprep.subr.mxu0 0.0
    %121 = vmatpush1.xpose.msra.mxu0 %v95
    %122 = vmatprep.subr.mxu0 0.0
    %123 = vmatpush1.xpose.msra.mxu0 %v94
    %124 = vmatprep.subr.mxu0 0.0
    %125 = vmatpush1.xpose.msra.mxu0 %v93
    %126 = vmatprep.subr.mxu0 0.0
    %127 = vmatpush1.xpose.msra.mxu0 %v92
    %128 = vmatprep.subr.mxu0 0.0
    %129 = vmatpush1.xpose.msra.mxu0 %v91
    %130 = vmatprep.subr.mxu0 0.0
    %131 = vmatpush1.xpose.msra.mxu0 %v90
    %132 = vmatprep.subr.mxu0 0.0
    %133 = vmatpush1.xpose.msra.mxu0 %v89
    %134 = vmatprep.subr.mxu0 0.0
    %135 = vmatpush1.xpose.msra.mxu0 %v88
    %136 = vmatprep.subr.mxu0 0.0
    %137 = vmatpush2.xpose.msra.mxu0 0.0
    %138 = vmatprep.subr.mxu0 0.0
    %139 = vmatpush2.xpose.msra.mxu0 0.0
    %140 = vmatprep.subr.mxu0 0.0
    %141 = vmatpush2.xpose.msra.mxu0 0.0
    %142 = vmatprep.subr.mxu0 0.0
    %143 = vmatpush2.xpose.msra.mxu0 0.0
    %144 = vmatprep.subr.mxu0 0.0
    %145 = vmatpush2.xpose.msra.mxu0 0.0
    %146 = vmatprep.subr.mxu0 0.0
    %147 = vmatpush2.xpose.msra.mxu0 0.0
    %148 = vmatprep.subr.mxu0 0.0
    %149 = vmatpush2.xpose.msra.mxu0 0.0
    %150 = vmatprep.subr.mxu0 0.0
    %151 = vmatpush2.xpose.msra.mxu0 0.0
    %152 = vmatprep.subr.mxu0 0.0
    %153 = vmatpush2.xpose.msra.mxu0 0.0
    %154 = vmatprep.subr.mxu0 0.0
    %155 = vmatpush2.xpose.msra.mxu0 0.0
    %156 = vmatprep.subr.mxu0 0.0
    %157 = vmatpush2.xpose.msra.mxu0 0.0
    %158 = vmatprep.subr.mxu0 0.0
    %159 = vmatpush2.xpose.msra.mxu0 0.0
    %160 = vmatprep.subr.mxu0 0.0
    %161 = vmatpush2.xpose.msra.mxu0 0.0
    %162 = vmatprep.subr.mxu0 0.0
    %163 = vmatpush2.xpose.msra.mxu0 0.0
    %164 = vmatprep.subr.mxu0 0.0
    %165 = vmatpush2.xpose.msra.mxu0 0.0
    %166 = vmatprep.subr.mxu0 0.0
    %167 = vmatpush2.xpose.msra.mxu0 0.0
    %168 = vmatprep.mubr.f32.mxu0 0.0
    %169 = vmatmul.mubr.f32.gmra.mxu0 %v71
    %v170 = vpop.f32.mrf.mxu0
    %v171 = vadd.f32 0.0, %v170
    %v172 = vpop.f32.mrf.mxu0
    %173 = vdwg.mxu0
    %v174 = vld [vmem:[%s4] sm:$0x1]
    %v176 = vlaneseq
    %v177 = vshrl.u32 %v176, 7
    %v178 = vsub.s32 0, %v177
    %v179 = vrot.slane %v174, %v178
    %v181 = vmul.f32 %v171, %v179
    %182 = vmatprep.subr.mxu0 0.0
    %183 = vmatpush1.xpose.msra.mxu0 %v87
    %184 = vmatprep.subr.mxu0 0.0
    %185 = vmatpush1.xpose.msra.mxu0 %v86
    %186 = vmatprep.subr.mxu0 0.0
    %187 = vmatpush1.xpose.msra.mxu0 %v85
    %188 = vmatprep.subr.mxu0 0.0
    %189 = vmatpush1.xpose.msra.mxu0 %v84
    %190 = vmatprep.subr.mxu0 0.0
    %191 = vmatpush1.xpose.msra.mxu0 %v83
    %192 = vmatprep.subr.mxu0 0.0
    %193 = vmatpush1.xpose.msra.mxu0 %v82
    %194 = vmatprep.subr.mxu0 0.0
    %195 = vmatpush1.xpose.msra.mxu0 %v81
    %196 = vmatprep.subr.mxu0 0.0
    %197 = vmatpush1.xpose.msra.mxu0 %v80
    %198 = vmatprep.subr.mxu0 0.0
    %199 = vmatpush1.xpose.msra.mxu0 %v79
    %200 = vmatprep.subr.mxu0 0.0
    %201 = vmatpush1.xpose.msra.mxu0 %v78
    %202 = vmatprep.subr.mxu0 0.0
    %203 = vmatpush1.xpose.msra.mxu0 %v77
    %204 = vmatprep.subr.mxu0 0.0
    %205 = vmatpush1.xpose.msra.mxu0 %v76
    %206 = vmatprep.subr.mxu0 0.0
    %207 = vmatpush1.xpose.msra.mxu0 %v75
    %208 = vmatprep.subr.mxu0 0.0
    %209 = vmatpush1.xpose.msra.mxu0 %v74
    %210 = vmatprep.subr.mxu0 0.0
    %211 = vmatpush1.xpose.msra.mxu0 %v73
    %212 = vmatprep.subr.mxu0 0.0
    %213 = vmatpush1.xpose.msra.mxu0 %v72
    %214 = vmatprep.subr.mxu0 0.0
    %215 = vmatpush2.xpose.msra.mxu0 0.0
    %216 = vmatprep.subr.mxu0 0.0
    %217 = vmatpush2.xpose.msra.mxu0 0.0
    %218 = vmatprep.subr.mxu0 0.0
    %219 = vmatpush2.xpose.msra.mxu0 0.0
    %220 = vmatprep.subr.mxu0 0.0
    %221 = vmatpush2.xpose.msra.mxu0 0.0
    %222 = vmatprep.subr.mxu0 0.0
    %223 = vmatpush2.xpose.msra.mxu0 0.0
    %224 = vmatprep.subr.mxu0 0.0
    %225 = vmatpush2.xpose.msra.mxu0 0.0
    %226 = vmatprep.subr.mxu0 0.0
    %227 = vmatpush2.xpose.msra.mxu0 0.0
    %228 = vmatprep.subr.mxu0 0.0
    %229 = vmatpush2.xpose.msra.mxu0 0.0
    %230 = vmatprep.subr.mxu0 0.0
    %231 = vmatpush2.xpose.msra.mxu0 0.0
    %232 = vmatprep.subr.mxu0 0.0
    %233 = vmatpush2.xpose.msra.mxu0 0.0
    %234 = vmatprep.subr.mxu0 0.0
    %235 = vmatpush2.xpose.msra.mxu0 0.0
    %236 = vmatprep.subr.mxu0 0.0
    %237 = vmatpush2.xpose.msra.mxu0 0.0
    %238 = vmatprep.subr.mxu0 0.0
    %239 = vmatpush2.xpose.msra.mxu0 0.0
    %240 = vmatprep.subr.mxu0 0.0
    %241 = vmatpush2.xpose.msra.mxu0 0.0
    %242 = vmatprep.subr.mxu0 0.0
    %243 = vmatpush2.xpose.msra.mxu0 0.0
    %244 = vmatprep.subr.mxu0 0.0
    %245 = vmatpush2.xpose.msra.mxu0 0.0
    %246 = vmatprep.mubr.f32.mxu0 0.0
    %247 = vmatmul.mubr.f32.gmra.mxu0 %v63
    %v248 = vpop.f32.mrf.mxu0
    %v249 = vadd.f32 %v181, %v248
    %v250 = vpop.f32.mrf.mxu0
    %251 = vdwg.mxu0
    %v252 = vld [vmem:[%s5] sm:$0x1]
    %v254 = vlaneseq
    %v255 = vshrl.u32 %v254, 7
    %v256 = vsub.s32 0, %v255
    %v257 = vrot.slane %v252, %v256
    %v259 = vadd.f32 %v249, %v257
    %260 = vst [vmem:[#allocation8] sm:$0xff] %v259
    // Predicated region
    $region38: #{tpu_custom_call.1} parent=1 // pred_check
      _
    $region39: #{tpu_custom_call.1} parent=1 // pred_check_branch
      %262 = sbr.rel (0) target = $region41
    $region40: #{tpu_custom_call.1} parent=1 // pred_region
      %s264 = ssub.s32 128, 128
      %265 = vsyncadd [#allocation4], %s264
      %s267 = sshll.u32 [#allocation8], 4
      %s268 = int_to_ptr.vmem [resolvable:$true] %s267
      %270 = dma.vmem_to_hbm [thread:$0]  %s268, 128, %s6, [#allocation4]
    $region41: #{tpu_custom_call.1} parent=1 // pred_fallthru
      _
    // Predicated region
    $region42: #{tpu_custom_call.1} parent=1 // pred_check
      _
    $region43: #{tpu_custom_call.1} parent=1 // pred_check_branch
      %272 = sbr.rel (0) target = $region45
    $region44: #{tpu_custom_call.1} parent=1 // pred_region
      %273 = dma.done [#allocation4], 128
    $region45: #{tpu_custom_call.1} parent=1 // pred_fallthru
      _
    %274 = vsyncpa [#allocation3], 1
    %275 = vsyncpa [#allocation6], 1
    %276 = vsyncpa [#allocation4], 1

</llo_original>
